<compile_context>
chip_gen: v7x
topology: tpu7x:2x2x1
jax: 0.10.0
libtpu: 0.0.40
codegen_flags: <defaults>
</compile_context>

<pallas_src>
import functools

import jax
import jax.numpy as jnp
from jax.experimental import pallas as pl
from jax.experimental.pallas import tpu as pltpu


def attention_kernel(x_ref, w_ref, b_ref, mask_ref, out_ref, a_ref):
    # x:    (TB, S, F)  input dtype (f32 or bf16)
    # w:    (1, F)      f32, lane-dense weight row
    # b:    (1, S)      f32
    # mask: (TB, S)     int32 (>0 = keep, 0 = masked out)
    x = x_ref[...].astype(jnp.float32)
    w = w_ref[...]
    b = b_ref[...]
    m = mask_ref[...]

    # eij = mm(x.view(-1, F), w).view(-1, S): VPU multiply + XLU lane reduce.
    eij = jnp.sum(x * w[:, None, :], axis=-1)        # (TB, S)

    # + bias, tanh (EUP transcendental slot)
    eij = jnp.tanh(eij + b)

    # eij[~mask] = -inf  (large finite negative: avoids NaN for all-masked rows,
    # identical result otherwise since exp underflows to exactly 0)
    eij = jnp.where(m > 0, eij, jnp.float32(-1e30))

    # softmax over the step dimension (dim=1)
    emax = jnp.max(eij, axis=1, keepdims=True)
    ex = jnp.exp(eij - emax)
    denom = jnp.sum(ex, axis=1, keepdims=True)
    a = ex * pl.reciprocal(denom, approx=True)       # EUP, frees VALU slots

    # NOTE: for production shapes with S < 128 / F % 128 != 0, pack the outputs
    # into a lane-dense slab in the wrapper to avoid masked partial stores.
    a_ref[...] = a.astype(a_ref.dtype)
    # weighted_input = x * a[..., None]; sum over step dim (VPU + sublane reduce)
    out_ref[...] = jnp.sum(x * a[:, :, None], axis=1).astype(out_ref.dtype)


def _choose_tile_b(B, S, F, itemsize):
    """Pick a sublane-aligned batch tile that fits comfortably in scoped VMEM.

    Conservative ~8 MiB budget for the double-buffered x tile so the same
    config works on v7x (64 MiB physical / 32 MiB scoped) as well as v5e/v6e.
    """
    budget = 8 * 1024 * 1024
    per_row = 2 * S * F * itemsize  # 2x for double buffering of the x tile
    tile = budget // max(per_row, 1)
    tile = max(8, (tile // 8) * 8)  # sublane-aligned
    if B <= tile:
        return B
    # Prefer a tile that divides B to avoid ragged trailing blocks.
    while tile > 8 and B % tile != 0:
        tile -= 8
    return tile


@functools.partial(jax.jit, static_argnames=("tile_b",))
def attention_forward(x, weight, bias, mask, *, tile_b=None):
    """x: (B, S, F); weight: (F, 1); bias: (S,); mask: (B, S) bool/int-like."""
    B, S, F = x.shape
    w_row = weight.reshape(1, F).astype(jnp.float32)   # lane-dense weight
    b2d = bias.reshape(1, S).astype(jnp.float32)
    mask_i = mask.astype(jnp.int32)

    tb = tile_b if tile_b is not None else _choose_tile_b(B, S, F, x.dtype.itemsize)
    tb = min(tb, B)
    grid = (pl.cdiv(B, tb),)

    out_shapes = (
        jax.ShapeDtypeStruct((B, F), x.dtype),       # weighted sum
        jax.ShapeDtypeStruct((B, S), jnp.float32),   # attention weights
    )

    return pl.pallas_call(
        attention_kernel,
        out_shape=out_shapes,
        grid=grid,
        in_specs=[
            pl.BlockSpec((tb, S, F), lambda i: (i, 0, 0)),   # x: tiled over batch
            pl.BlockSpec((1, F), lambda i: (0, 0)),          # weight: resident
            pl.BlockSpec((1, S), lambda i: (0, 0)),          # bias: resident
            pl.BlockSpec((tb, S), lambda i: (i, 0)),         # mask: tiled
        ],
        out_specs=(
            pl.BlockSpec((tb, F), lambda i: (i, 0)),
            pl.BlockSpec((tb, S), lambda i: (i, 0)),
        ),
        compiler_params=pltpu.CompilerParams(
            dimension_semantics=("parallel",),               # megacore on v7x
        ),
    )(x, w_row, b2d, mask_i)


def attention_reference(x, weight, bias, mask):
    """Pure-JAX reference mirroring the PyTorch forward (f32)."""
    B, S, F = x.shape
    xf = x.astype(jnp.float32)
    eij = (xf.reshape(-1, F) @ weight.astype(jnp.float32)).reshape(B, S)
    eij = jnp.tanh(eij + bias[None, :].astype(jnp.float32))
    eij = jnp.where(mask.astype(bool), eij, -jnp.inf)
    a = jax.nn.softmax(eij, axis=1)
    out = jnp.sum(xf * a[:, :, None], axis=1)
    return out, a


if __name__ == "__main__":
    # Shapes consistent with the module: feature_dim=32, step_dim=8.
    # batch=16 with tile_b=8 exercises the batch-axis grid / pipelining.
    B, S, F = 16, 8, 32

    key = jax.random.PRNGKey(0)
    kx, kw, km = jax.random.split(key, 3)

    x = jax.random.normal(kx, (B, S, F), dtype=jnp.float32)

    # Xavier-uniform init for weight (F, 1), zeros for bias (step_dim,)
    bound = (6.0 / (F + 1)) ** 0.5
    weight = jax.random.uniform(kw, (F, 1), minval=-bound, maxval=bound,
                                dtype=jnp.float32)
    bias = jnp.zeros((S,), dtype=jnp.float32)

    # Deterministic mask: mask out the last 2 steps of odd batch elements.
    mask = jnp.ones((B, S), dtype=jnp.int32)
    mask = mask.at[1::2, S - 2:].set(0)

    out, a = attention_forward(x, weight, bias, mask, tile_b=8)
    out = jax.block_until_ready(out)
    a = jax.block_until_ready(a)

    ref_out, ref_a = attention_reference(x, weight, bias, mask)
    # Slightly loose tolerance because the softmax denominator uses the EUP
    # approximate reciprocal.
    assert jnp.allclose(out.astype(jnp.float32), ref_out, atol=2e-3, rtol=2e-3), \
        "output mismatch"
    assert jnp.allclose(a, ref_a, atol=2e-3, rtol=2e-3), "attention mismatch"

    print("KERNEL_OK")
</pallas_src>

<mosaic_0001>
module attributes {stable_mosaic.version = 11 : i64} {
  func.func @attention_kernel(%arg0: i32, %arg1: memref<8x8x32xf32, #tpu.memory_space<vmem>>, %arg2: memref<1x32xf32, #tpu.memory_space<vmem>>, %arg3: memref<1x8xf32, #tpu.memory_space<vmem>>, %arg4: memref<8x8xi32, #tpu.memory_space<vmem>>, %arg5: memref<8x32xf32, #tpu.memory_space<vmem>>, %arg6: memref<8x8xf32, #tpu.memory_space<vmem>>) attributes {dimension_semantics = [#tpu.dimension_semantics<parallel>], iteration_bounds = array<i64: 2>, scalar_prefetch = 0 : i64, scratch_operands = 0 : i64, tpu.core_type = #tpu.core_type<tc>, window_params = [{transform_indices = @transform_0, window_bounds = array<i64: 8, 8, 32>}, {pipeline_mode = #tpu.pipeline_mode<synchronous>, transform_indices = @transform_1, window_bounds = array<i64: 1, 32>}, {pipeline_mode = #tpu.pipeline_mode<synchronous>, transform_indices = @transform_2, window_bounds = array<i64: 1, 8>}, {transform_indices = @transform_3, window_bounds = array<i64: 8, 8>}, {transform_indices = @transform_4, window_bounds = array<i64: 8, 32>}, {transform_indices = @transform_5, window_bounds = array<i64: 8, 8>}]} {
    %c0 = arith.constant 0 : index
    %c0_0 = arith.constant 0 : index
    %c0_1 = arith.constant 0 : index
    %0 = vector.load %arg1[%c0, %c0_0, %c0_1] : memref<8x8x32xf32, #tpu.memory_space<vmem>>, vector<8x8x32xf32>
    %c0_2 = arith.constant 0 : index
    %c0_3 = arith.constant 0 : index
    %1 = vector.load %arg2[%c0_2, %c0_3] : memref<1x32xf32, #tpu.memory_space<vmem>>, vector<1x32xf32>
    %c0_4 = arith.constant 0 : index
    %c0_5 = arith.constant 0 : index
    %2 = vector.load %arg3[%c0_4, %c0_5] : memref<1x8xf32, #tpu.memory_space<vmem>>, vector<1x8xf32>
    %c0_6 = arith.constant 0 : index
    %c0_7 = arith.constant 0 : index
    %3 = vector.load %arg4[%c0_6, %c0_7] : memref<8x8xi32, #tpu.memory_space<vmem>>, vector<8x8xi32>
    %4 = vector.shape_cast %1 : vector<1x32xf32> to vector<1x1x32xf32>
    %5 = vector.broadcast %4 : vector<1x1x32xf32> to vector<8x8x32xf32>
    %6 = arith.mulf %0, %5 : vector<8x8x32xf32>
    %cst = arith.constant dense<0.000000e+00> : vector<8x8xf32>
    %7 = vector.multi_reduction <add>, %6, %cst [2] : vector<8x8x32xf32> to vector<8x8xf32>
    %8 = vector.broadcast %2 : vector<1x8xf32> to vector<8x8xf32>
    %9 = arith.addf %7, %8 : vector<8x8xf32>
    %10 = math.tanh %9 : vector<8x8xf32>
    %c0_i32 = arith.constant 0 : i32
    %11 = vector.broadcast %c0_i32 : i32 to vector<8x8xi32>
    %12 = arith.cmpi sgt, %3, %11 : vector<8x8xi32>
    %cst_8 = arith.constant -1.000000e+30 : f32
    %13 = vector.broadcast %cst_8 : f32 to vector<8x8xf32>
    %14 = arith.select %12, %10, %13 : vector<8x8xi1>, vector<8x8xf32>
    %cst_9 = arith.constant dense<0xFF800000> : vector<8xf32>
    %15 = vector.multi_reduction <maximumf>, %14, %cst_9 [1] : vector<8x8xf32> to vector<8xf32>
    %16 = vector.shape_cast %15 : vector<8xf32> to vector<8x1xf32>
    %17 = vector.broadcast %16 : vector<8x1xf32> to vector<8x8xf32>
    %18 = arith.subf %14, %17 : vector<8x8xf32>
    %19 = math.exp %18 : vector<8x8xf32>
    %cst_10 = arith.constant dense<0.000000e+00> : vector<8xf32>
    %20 = vector.multi_reduction <add>, %19, %cst_10 [1] : vector<8x8xf32> to vector<8xf32>
    %21 = vector.shape_cast %20 : vector<8xf32> to vector<8x1xf32>
    %22 = tpu.reciprocal %21 {approx = true} : vector<8x1xf32> -> vector<8x1xf32>
    %23 = vector.broadcast %22 : vector<8x1xf32> to vector<8x8xf32>
    %24 = arith.mulf %19, %23 : vector<8x8xf32>
    %c0_11 = arith.constant 0 : index
    %c0_12 = arith.constant 0 : index
    %25 = vector.load %arg6[%c0_11, %c0_12] : memref<8x8xf32, #tpu.memory_space<vmem>>, vector<8x8xf32>
    tpu.vector_store %arg6[%c0_11, %c0_12], %24 {strides = array<i32>} : memref<8x8xf32, #tpu.memory_space<vmem>>, vector<8x8xf32>,
    %26 = vector.shape_cast %24 : vector<8x8xf32> to vector<8x8x1xf32>
    %27 = vector.broadcast %26 : vector<8x8x1xf32> to vector<8x8x32xf32>
    %28 = arith.mulf %0, %27 : vector<8x8x32xf32>
    %cst_13 = arith.constant dense<0.000000e+00> : vector<8x32xf32>
    %29 = vector.multi_reduction <add>, %28, %cst_13 [1] : vector<8x8x32xf32> to vector<8x32xf32>
    %c0_14 = arith.constant 0 : index
    %c0_15 = arith.constant 0 : index
    %30 = vector.load %arg5[%c0_14, %c0_15] : memref<8x32xf32, #tpu.memory_space<vmem>>, vector<8x32xf32>
    tpu.vector_store %arg5[%c0_14, %c0_15], %29 {strides = array<i32>} : memref<8x32xf32, #tpu.memory_space<vmem>>, vector<8x32xf32>,
    return
  }
  func.func @transform_0(%arg0: i32) -> (i32, i32, i32) {
    %c0_i32 = arith.constant 0 : i32
    %c0_i32_0 = arith.constant 0 : i32
    %c0_i32_1 = arith.constant 0 : i32
    return %arg0, %c0_i32, %c0_i32_0 : i32, i32, i32
  }
  func.func @transform_1(%arg0: i32) -> (i32, i32) {
    %c0_i32 = arith.constant 0 : i32
    %c0_i32_0 = arith.constant 0 : i32
    %c0_i32_1 = arith.constant 0 : i32
    return %c0_i32, %c0_i32_0 : i32, i32
  }
  func.func @transform_2(%arg0: i32) -> (i32, i32) {
    %c0_i32 = arith.constant 0 : i32
    %c0_i32_0 = arith.constant 0 : i32
    %c0_i32_1 = arith.constant 0 : i32
    return %c0_i32, %c0_i32_0 : i32, i32
  }
  func.func @transform_3(%arg0: i32) -> (i32, i32) {
    %c0_i32 = arith.constant 0 : i32
    %c0_i32_0 = arith.constant 0 : i32
    return %arg0, %c0_i32 : i32, i32
  }
  func.func @transform_4(%arg0: i32) -> (i32, i32) {
    %c0_i32 = arith.constant 0 : i32
    %c0_i32_0 = arith.constant 0 : i32
    return %arg0, %c0_i32 : i32, i32
  }
  func.func @transform_5(%arg0: i32) -> (i32, i32) {
    %c0_i32 = arith.constant 0 : i32
    %c0_i32_0 = arith.constant 0 : i32
    return %arg0, %c0_i32 : i32, i32
  }
}

</mosaic_0001>

<llo_original>
// kernel: attention_forward.1
$region0: #{attention_forward.1}
  #allocation0 [shape = 'u32[]', space=smem, size = 0x4, offset = 0x4, fixed_abs, tag = 'smem constant byte address 0x4 - core index']
  #allocation1 [shape = 'u32[144,128]{1,0:T(1,128)}', space=vmem, size = 0x12000, scoped, tag = 'internal scratch']
  %s0 = inlined_call_operand.hbm [shape: f32[16,8,32], index: 0, kind: input, shape index: {}]
  %s1 = inlined_call_operand.vmem [shape: f32[1,32], index: 1, kind: input, shape index: {}]
  %s2 = inlined_call_operand.vmem [shape: f32[1,8], index: 2, kind: input, shape index: {}]
  %s3 = inlined_call_operand.vmem [shape: s32[16,8], index: 3, kind: input, shape index: {}]
  %s4 = inlined_call_operand.hbm [shape: f32[16,32], index: 4, kind: output, shape index: {0}]
  %s5 = inlined_call_operand.vmem [shape: f32[16,8], index: 5, kind: output, shape index: {1}]
  %6 = xla_tuple %s4, %s5
  %s7 = sld [smem:[#allocation0]]
  $region61: #{attention_forward.1} parent=0
    _
  %s9 = ssub.s32 1, %s7
  %s10 = scalar_select 0, %s9, %s7
  $region1: #{attention_forward.1} parent=0
    #allocation2 [shape = 'u8[65536]{0}', space=vmem, size = 0x10000, scoped, tag = 'input window, operand 0']
    #allocation3 [shape = 's32[2]{0}', space=sflag, size = 0x8, scoped, tag = 'scoped memory for attention_forward.1']
    #allocation4 [shape = 's32[2]{0}', space=sflag, size = 0x8, scoped, tag = 'scoped memory for attention_forward.1']
    #allocation5 [shape = 'u8[8192]{0}', space=vmem, size = 0x2000, scoped, tag = 'output window, operand 0']
    %11 = vsyncpa [#allocation3], 0
    %s12 = scalar_lea.sflag [#allocation3], 1
    %13 = vsyncpa %s12, 0
    %14 = vsyncpa [#allocation4], 0
    %s15 = scalar_lea.sflag [#allocation4], 1
    %16 = vsyncpa %s15, 0
    loop: start=0, step=1, limit=4
    $region2: #{attention_forward.1} parent=1 // loop_pre_header
      _
    $region3: #{attention_forward.1} parent=1 // loop_header
      %s18 = sphi 0, %s22
      %p19 = scmp.ge.s32.totalorder %s18, 4
      %s28 = sphi 0, %s30
      %s31 = sphi 0, %s28
      %s32 = sphi 0, %s31
      %s48 = sphi 0, %s32
      %s52 = sphi 0, %s52
      %s54 = sphi 0, %s52
      %s55 = sphi 0, %s54
      %s69 = sphi 0, %s55
      %s73 = sphi 0, %s73
      %s75 = sphi 0, %s73
      %s76 = sphi 0, %s75
      %s90 = sphi 0, %s76
      %s96 = sphi 0, %s98
      %s99 = sphi 0, %s96
      %s100 = sphi 0, %s99
      %s116 = sphi 0, %s100
      %s122 = sphi 0, %s124
      %s125 = sphi 0, %s122
      %s126 = sphi 0, %s125
      %s142 = sphi 0, %s126
      %s148 = sphi 0, %s150
      %s151 = sphi 0, %s148
      %s152 = sphi 0, %s151
      %s168 = sphi 0, %s152
    $region4: #{attention_forward.1} parent=1 // loop_header_branch
      %21 = sbr.rel (%p19) target = $region8
    $region5: #{attention_forward.1} parent=1 // loop_body
      %s23 = ssub.s32 %s18, 1
      %s24 = ssub.s32 %s18, 2
      %s25 = sadd.s32 %s18, 1
      %s26 = ssub.s32 %s18, %s25
      %p27 = scmp.eq.s32.totalorder %s26, 0
      %s29 = sadd.s32 %s28, 1
      %s30 = scalar_select %p27, %s28, %s29
      %p33 = pneg %p27
      %p34 = scmp.eq.s32.totalorder %s18, 1
      %p35 = por %p33, %p34
      %p36 = scmp.ne.s32.totalorder %s28, %s31
      %p37 = scmp.eq.s32.totalorder %s18, 0
      %p38 = por %p36, %p37
      %p39 = scmp.ne.s32.totalorder %s28, %s31
      %p40 = scmp.eq.s32.totalorder %s23, 1
      %p41 = por %p39, %p40
      %p42 = scmp.ne.s32.totalorder %s31, %s32
      %p43 = scmp.eq.s32.totalorder %s23, 0
      %p44 = por %p42, %p43
      %p45 = scmp.ne.s32.totalorder %s31, %s32
      %p46 = scmp.eq.s32.totalorder %s24, 1
      %p47 = por %p45, %p46
      %p49 = scmp.ne.s32.totalorder %s32, %s48
      %p50 = scmp.eq.s32.totalorder %s24, 0
      %p51 = por %p49, %p50
      %s53 = sadd.s32 %s52, 1
      %p56 = scmp.eq.s32.totalorder %s18, 1
      %p57 = scmp.ne.s32.totalorder %s52, %s54
      %p58 = scmp.eq.s32.totalorder %s18, 0
      %p59 = por %p57, %p58
      %p60 = scmp.ne.s32.totalorder %s52, %s54
      %p61 = scmp.eq.s32.totalorder %s23, 1
      %p62 = por %p60, %p61
      %p63 = scmp.ne.s32.totalorder %s54, %s55
      %p64 = scmp.eq.s32.totalorder %s23, 0
      %p65 = por %p63, %p64
      %p66 = scmp.ne.s32.totalorder %s54, %s55
      %p67 = scmp.eq.s32.totalorder %s24, 1
      %p68 = por %p66, %p67
      %p70 = scmp.ne.s32.totalorder %s55, %s69
      %p71 = scmp.eq.s32.totalorder %s24, 0
      %p72 = por %p70, %p71
      %s74 = sadd.s32 %s73, 1
      %p77 = scmp.eq.s32.totalorder %s18, 1
      %p78 = scmp.ne.s32.totalorder %s73, %s75
      %p79 = scmp.eq.s32.totalorder %s18, 0
      %p80 = por %p78, %p79
      %p81 = scmp.ne.s32.totalorder %s73, %s75
      %p82 = scmp.eq.s32.totalorder %s23, 1
      %p83 = por %p81, %p82
      %p84 = scmp.ne.s32.totalorder %s75, %s76
      %p85 = scmp.eq.s32.totalorder %s23, 0
      %p86 = por %p84, %p85
      %p87 = scmp.ne.s32.totalorder %s75, %s76
      %p88 = scmp.eq.s32.totalorder %s24, 1
      %p89 = por %p87, %p88
      %p91 = scmp.ne.s32.totalorder %s76, %s90
      %p92 = scmp.eq.s32.totalorder %s24, 0
      %p93 = por %p91, %p92
      %s94 = ssub.s32 %s18, %s25
      %p95 = scmp.eq.s32.totalorder %s94, 0
      %s97 = sadd.s32 %s96, 1
      %s98 = scalar_select %p95, %s96, %s97
      %p101 = pneg %p95
      %p102 = scmp.eq.s32.totalorder %s18, 1
      %p103 = por %p101, %p102
      %p104 = scmp.ne.s32.totalorder %s96, %s99
      %p105 = scmp.eq.s32.totalorder %s18, 0
      %p106 = por %p104, %p105
      %p107 = scmp.ne.s32.totalorder %s96, %s99
      %p108 = scmp.eq.s32.totalorder %s23, 1
      %p109 = por %p107, %p108
      %p110 = scmp.ne.s32.totalorder %s99, %s100
      %p111 = scmp.eq.s32.totalorder %s23, 0
      %p112 = por %p110, %p111
      %p113 = scmp.ne.s32.totalorder %s99, %s100
      %p114 = scmp.eq.s32.totalorder %s24, 1
      %p115 = por %p113, %p114
      %p117 = scmp.ne.s32.totalorder %s100, %s116
      %p118 = scmp.eq.s32.totalorder %s24, 0
      %p119 = por %p117, %p118
      %s120 = ssub.s32 %s18, %s25
      %p121 = scmp.eq.s32.totalorder %s120, 0
      %s123 = sadd.s32 %s122, 1
      %s124 = scalar_select %p121, %s122, %s123
      %p127 = pneg %p121
      %p128 = scmp.eq.s32.totalorder %s18, 1
      %p129 = por %p127, %p128
      %p130 = scmp.ne.s32.totalorder %s122, %s125
      %p131 = scmp.eq.s32.totalorder %s18, 0
      %p132 = por %p130, %p131
      %p133 = scmp.ne.s32.totalorder %s122, %s125
      %p134 = scmp.eq.s32.totalorder %s23, 1
      %p135 = por %p133, %p134
      %p136 = scmp.ne.s32.totalorder %s125, %s126
      %p137 = scmp.eq.s32.totalorder %s23, 0
      %p138 = por %p136, %p137
      %p139 = scmp.ne.s32.totalorder %s125, %s126
      %p140 = scmp.eq.s32.totalorder %s24, 1
      %p141 = por %p139, %p140
      %p143 = scmp.ne.s32.totalorder %s126, %s142
      %p144 = scmp.eq.s32.totalorder %s24, 0
      %p145 = por %p143, %p144
      %s146 = ssub.s32 %s18, %s25
      %p147 = scmp.eq.s32.totalorder %s146, 0
      %s149 = sadd.s32 %s148, 1
      %s150 = scalar_select %p147, %s148, %s149
      %p153 = pneg %p147
      %p154 = scmp.eq.s32.totalorder %s18, 1
      %p155 = por %p153, %p154
      %p156 = scmp.ne.s32.totalorder %s148, %s151
      %p157 = scmp.eq.s32.totalorder %s18, 0
      %p158 = por %p156, %p157
      %p159 = scmp.ne.s32.totalorder %s148, %s151
      %p160 = scmp.eq.s32.totalorder %s23, 1
      %p161 = por %p159, %p160
      %p162 = scmp.ne.s32.totalorder %s151, %s152
      %p163 = scmp.eq.s32.totalorder %s23, 0
      %p164 = por %p162, %p163
      %p165 = scmp.ne.s32.totalorder %s151, %s152
      %p166 = scmp.eq.s32.totalorder %s24, 1
      %p167 = por %p165, %p166
      %p169 = scmp.ne.s32.totalorder %s152, %s168
      %p170 = scmp.eq.s32.totalorder %s24, 0
      %p171 = por %p169, %p170
      %p172 = scmp.le.s32.totalorder 1, %s18
      %p173 = scmp.lt.s32.totalorder %s18, 3
      %p174 = pnand %p172, %p173
      %p175 = pneg %p174
      // Predicated region
      $region9: #{attention_forward.1} parent=5 // pred_check
        _
      $region10: #{attention_forward.1} parent=5 // pred_check_branch
        %177 = sbr.rel (%p174) target = $region12
      $region11: #{attention_forward.1} parent=5 // pred_region
        %s178 = ssub.s32 %s18, 1
        // Predicated region
        $region13: #{attention_forward.1} parent=11 // pred_check
          %p179 = pneg %p65
        $region14: #{attention_forward.1} parent=11 // pred_check_branch
          %181 = sbr.rel (%p179) target = $region16
        $region15: #{attention_forward.1} parent=11 // pred_region
          _
        $region16: #{attention_forward.1} parent=11 // pred_fallthru
          _
        // Predicated region
        $region17: #{attention_forward.1} parent=11 // pred_check
          %p182 = pneg %p86
        $region18: #{attention_forward.1} parent=11 // pred_check_branch
          %184 = sbr.rel (%p182) target = $region20
        $region19: #{attention_forward.1} parent=11 // pred_region
          _
        $region20: #{attention_forward.1} parent=11 // pred_fallthru
          _
      $region12: #{attention_forward.1} parent=5 // pred_fallthru
        _
      %p185 = scmp.lt.s32.totalorder %s18, 2
      // Predicated region
      $region21: #{attention_forward.1} parent=5 // pred_check
        %p186 = pneg %p185
      $region22: #{attention_forward.1} parent=5 // pred_check_branch
        %188 = sbr.rel (%p186) target = $region24
      $region23: #{attention_forward.1} parent=5 // pred_region
        // Predicated region
        $region25: #{attention_forward.1} parent=23 // pred_check
          %p189 = pneg %p38
        $region26: #{attention_forward.1} parent=23 // pred_check_branch
          %191 = sbr.rel (%p189) target = $region28
        $region27: #{attention_forward.1} parent=23 // pred_region
          %s192 = sand.u32 %s28, 1
          %s193 = scalar_lea.sflag [#allocation3], %s192
          %s194 = sand.u32 %s28, 1
          %s195 = smul.addr %s194, 64
          %s196 = scalar_lea.vmem [#allocation2], %s195
          %s197 = smul.u32 8, %s18
          %s199 = ssub.s32 1024, 1024
          %200 = vsyncadd %s193, %s199
          %s201 = smul.addr %s197, 128
          %s202 = scalar_lea.hbm %s0, %s201
          %s203 = sshll.u32 %s196, 4
          %s204 = int_to_ptr.vmem [resolvable:$true] %s203
          %209 = dma.hbm_to_vmem [thread:$0]  %s202, 1024, %s204, %s193, 128, 128, 8
        $region28: #{attention_forward.1} parent=23 // pred_fallthru
          _
        // Predicated region
        $region29: #{attention_forward.1} parent=23 // pred_check
          %p210 = pneg %p106
        $region30: #{attention_forward.1} parent=23 // pred_check_branch
          %212 = sbr.rel (%p210) target = $region32
        $region31: #{attention_forward.1} parent=23 // pred_region
          %p213 = scmp.lt.s32.totalorder %s18, 1
          %s214 = scalar_select %p213, %s18, 1
          %s215 = smul.addr %s214, 8
          %s216 = scalar_lea.vmem %s3, %s215
        $region32: #{attention_forward.1} parent=23 // pred_fallthru
          _
      $region24: #{attention_forward.1} parent=5 // pred_fallthru
        _
      %p217 = scmp.le.s32.totalorder 1, %s18
      %p218 = scmp.lt.s32.totalorder %s18, 3
      %p219 = pnand %p217, %p218
      %p220 = pneg %p219
      // Predicated region
      $region33: #{attention_forward.1} parent=5 // pred_check
        _
      $region34: #{attention_forward.1} parent=5 // pred_check_branch
        %222 = sbr.rel (%p219) target = $region36
      $region35: #{attention_forward.1} parent=5 // pred_region
        %s223 = ssub.s32 %s18, 1
        %s224 = sand.u32 %s31, 1
        %s225 = scalar_lea.sflag [#allocation3], %s224
        %s226 = sand.u32 %s31, 1
        %s227 = smul.addr %s226, 64
        %s228 = scalar_lea.vmem [#allocation2], %s227
        // Predicated region
        $region37: #{attention_forward.1} parent=35 // pred_check
          %p229 = pneg %p44
        $region38: #{attention_forward.1} parent=35 // pred_check_branch
          %231 = sbr.rel (%p229) target = $region40
        $region39: #{attention_forward.1} parent=35 // pred_region
          %232 = dma.done %s225, 1024
        $region40: #{attention_forward.1} parent=35 // pred_fallthru
          _
        %s233 = sand.u32 %s31, 1
        %s234 = scalar_lea.sflag [#allocation3], %s233
        %s235 = sand.u32 %s31, 1
        %s236 = smul.addr %s235, 64
        %s237 = scalar_lea.vmem [#allocation2], %s236
        %p238 = pneg %p44
        %p239 = pneg %p41
        %p240 = pneg %p65
        %p241 = pneg %p62
        %p242 = pneg %p86
        %p243 = pneg %p83
        %p244 = scmp.lt.s32.totalorder %s23, 1
        %s245 = scalar_select %p244, %s23, 1
        %s246 = smul.addr %s245, 8
        %s247 = scalar_lea.vmem %s3, %s246
        %p248 = pneg %p112
        %p249 = pneg %p109
        %p250 = pneg %p138
        %p251 = pneg %p135
        %s252 = sand.u32 %s125, 1
        %s253 = scalar_lea.sflag [#allocation4], %s252
        %s254 = sand.u32 %s125, 1
        %s255 = smul.addr %s254, 8
        %s256 = scalar_lea.vmem [#allocation5], %s255
        %p257 = pneg %p164
        %p258 = pneg %p161
        %p259 = scmp.lt.s32.totalorder %s23, 1
        %s260 = scalar_select %p259, %s23, 1
        %s261 = smul.addr %s260, 8
        %s262 = scalar_lea.vmem %s5, %s261
        %s263 = smul.u32 8, %s23
        %p264 = scmp.lt.s32.totalorder %s23, 1
        %s265 = scalar_select %p264, %s23, 1
        %s266 = smul.addr %s265, 8
        %s267 = scalar_lea.vmem %s3, %s266
        %p268 = scmp.lt.s32.totalorder %s23, 1
        %s269 = scalar_select %p268, %s23, 1
        %s270 = smul.addr %s269, 8
        %s271 = scalar_lea.vmem %s5, %s270
        %v272 = vld [vmem:[%s228] sm:$0xff]
        %v273 = vld [vmem:[%s228 + $0x8] sm:$0xff]
        %v274 = vld [vmem:[%s228 + $0x10] sm:$0xff]
        %v275 = vld [vmem:[%s228 + $0x18] sm:$0xff]
        %v276 = vld [vmem:[%s228 + $0x20] sm:$0xff]
        %v277 = vld [vmem:[%s228 + $0x28] sm:$0xff]
        %v278 = vld [vmem:[%s228 + $0x30] sm:$0xff]
        %v279 = vld [vmem:[%s228 + $0x38] sm:$0xff]
        %v280 = vld [vmem:[%s1] sm:$0x1]
        %v281 = vld [vmem:[%s2] sm:$0x1]
        %v282 = vld [vmem:[%s267] sm:$0xff]
        %v284 = vlaneseq
        %v285 = vshrl.u32 %v284, 7
        %v286 = vsub.s32 0, %v285
        %v287 = vrot.slane %v280, %v286
        %v289 = vmul.f32 %v272, %v287
        %v290 = vmul.f32 %v273, %v287
        %v291 = vmul.f32 %v274, %v287
        %v292 = vmul.f32 %v275, %v287
        %v293 = vmul.f32 %v276, %v287
        %v294 = vmul.f32 %v277, %v287
        %v295 = vmul.f32 %v278, %v287
        %v296 = vmul.f32 %v279, %v287
        %vm297 = vcmask 261120
        %v298 = vsel %vm297, %v289, 0.0
        %299 = vadd.xlane.f32.xlu0 %v298
        %v300 = vpop.xlane.xlu0 %299
        %v301 = vsel %vm297, %v290, 0.0
        %302 = vadd.xlane.f32.xlu0 %v301
        %v303 = vpop.xlane.xlu0 %302
        %v304 = vsel %vm297, %v291, 0.0
        %305 = vadd.xlane.f32.xlu0 %v304
        %v306 = vpop.xlane.xlu0 %305
        %v307 = vsel %vm297, %v292, 0.0
        %308 = vadd.xlane.f32.xlu0 %v307
        %v309 = vpop.xlane.xlu0 %308
        %v310 = vsel %vm297, %v293, 0.0
        %311 = vadd.xlane.f32.xlu0 %v310
        %v312 = vpop.xlane.xlu0 %311
        %v313 = vsel %vm297, %v294, 0.0
        %314 = vadd.xlane.f32.xlu0 %v313
        %v315 = vpop.xlane.xlu0 %314
        %v316 = vsel %vm297, %v295, 0.0
        %317 = vadd.xlane.f32.xlu0 %v316
        %v318 = vpop.xlane.xlu0 %317
        %v319 = vsel %vm297, %v296, 0.0
        %320 = vadd.xlane.f32.xlu0 %v319
        %v321 = vpop.xlane.xlu0 %320
        %v323 = vlaneseq
        %v324 = vshrl.u32 %v323, 7
        %v325 = vsub.s32 0, %v324
        %v326 = vrot.slane %v281, %v325
        %328 = vbcast.lane.b32.xlu0 %v326, 256
        %v329 = vpop.permute.xlu0 %328
        %v331 = vadd.f32 %v300, %v329
        %v332 = vadd.f32 %v303, %v329
        %v333 = vadd.f32 %v306, %v329
        %v334 = vadd.f32 %v309, %v329
        %v335 = vadd.f32 %v312, %v329
        %v336 = vadd.f32 %v315, %v329
        %v337 = vadd.f32 %v318, %v329
        %v338 = vadd.f32 %v321, %v329
        %v339 = vtanh.pop %v331
        %v340 = vtanh.pop %v332
        %v341 = vtanh.pop %v333
        %v342 = vtanh.pop %v334
        %v343 = vtanh.pop %v335
        %v344 = vtanh.pop %v336
        %v345 = vtanh.pop %v337
        %v346 = vtanh.pop %v338
        %vm347 = vcmp.gt.s32.totalorder %v282, 0
        %356 = vset.pattern.permute.xlu0 0
        %357 = vperm.xlu0 %356, %v339
        %v358 = vpop.permute.xlu0 %357
        %359 = vset.pattern.permute.xlu0 0
        %360 = vperm.xlu0 %359, %v340
        %v361 = vpop.permute.xlu0 %360
        %362 = vset.pattern.permute.xlu0 0
        %363 = vperm.xlu0 %362, %v341
        %v364 = vpop.permute.xlu0 %363
        %365 = vset.pattern.permute.xlu0 0
        %366 = vperm.xlu0 %365, %v342
        %v367 = vpop.permute.xlu0 %366
        %368 = vset.pattern.permute.xlu0 0
        %369 = vperm.xlu0 %368, %v343
        %v370 = vpop.permute.xlu0 %369
        %371 = vset.pattern.permute.xlu0 0
        %372 = vperm.xlu0 %371, %v344
        %v373 = vpop.permute.xlu0 %372
        %374 = vset.pattern.permute.xlu0 0
        %375 = vperm.xlu0 %374, %v345
        %v376 = vpop.permute.xlu0 %375
        %377 = vset.pattern.permute.xlu0 0
        %378 = vperm.xlu0 %377, %v346
        %v379 = vpop.permute.xlu0 %378
        %v380 = vlaneseq
        %v381 = vand.u32 %v380, 127
        %v382 = vlaneseq
        %v383 = vshrl.u32 %v382, 7
        %v384 = vsub.s32 %v381, %v383
        %v385 = vrot.slane %v358, %v384
        %v386 = vlaneseq
        %v387 = vshrl.u32 %v386, 7
        %v388 = vsub.s32 %v381, %v387
        %v389 = vrot.slane %v361, %v388
        %v390 = vlaneseq
        %v391 = vshrl.u32 %v390, 7
        %v392 = vsub.s32 %v381, %v391
        %v393 = vrot.slane %v364, %v392
        %v394 = vlaneseq
        %v395 = vshrl.u32 %v394, 7
        %v396 = vsub.s32 %v381, %v395
        %v397 = vrot.slane %v367, %v396
        %v398 = vlaneseq
        %v399 = vshrl.u32 %v398, 7
        %v400 = vsub.s32 %v381, %v399
        %v401 = vrot.slane %v370, %v400
        %v402 = vlaneseq
        %v403 = vshrl.u32 %v402, 7
        %v404 = vsub.s32 %v381, %v403
        %v405 = vrot.slane %v373, %v404
        %v406 = vlaneseq
        %v407 = vshrl.u32 %v406, 7
        %v408 = vsub.s32 %v381, %v407
        %v409 = vrot.slane %v376, %v408
        %v410 = vlaneseq
        %v411 = vshrl.u32 %v410, 7
        %v412 = vsub.s32 %v381, %v411
        %v413 = vrot.slane %v379, %v412
        %vm414 = vcmask 1041409
        %v415 = vsel %vm414, %v389, %v385
        %vm416 = vcmask 1042434
        %v417 = vsel %vm416, %v393, %v415
        %vm418 = vcmask 1043459
        %v419 = vsel %vm418, %v397, %v417
        %vm420 = vcmask 1044484
        %v421 = vsel %vm420, %v401, %v419
        %vm422 = vcmask 1045509
        %v423 = vsel %vm422, %v405, %v421
        %vm424 = vcmask 1046534
        %v425 = vsel %vm424, %v409, %v423
        %vm426 = vcmask 1047559
        %v427 = vsel %vm426, %v413, %v425
        %v429 = vsel %vm347, %v427, -1e+30
        %vm430 = vcmask 64512
        %v431 = vsel %vm430, %v429, -inf
        %432 = vmax.xlane.f32.xlu0 %v431
        %v433 = vpop.xlane.xlu0 %432
        %v434 = vsub.f32 %v429, %v433
        %v435 = vmul.f32 %v434, 1.442695
        %v436 = vpow.pop %v435
        %v437 = vsel %vm430, %v436, 0.0
        %438 = vadd.xlane.f32.xlu0 %v437
        %v439 = vpop.xlane.xlu0 %438
        %v440 = vrcp.pop %v439
        %v441 = vmul.f32 %v436, %v440
        %442 = vst.msk [vmem:[%s271] sm:$0xff] %vm430, %v441
        %v443 = vlaneseq
        %v444 = vshrl.u32 %v443, 7
        %v445 = vsub.s32 0, %v444
        %v446 = vrot.slane %v441, %v445
        %448 = vbcast.lane.b32.xlu0 %v446, 256
        %v449 = vpop.permute.xlu0 %448
        %v450 = vlaneseq
        %v451 = vshrl.u32 %v450, 7
        %v452 = vsub.s32 1, %v451
        %v453 = vrot.slane %v441, %v452
        %455 = vbcast.lane.b32.xlu0 %v453, 256
        %v456 = vpop.permute.xlu0 %455
        %v457 = vlaneseq
        %v458 = vshrl.u32 %v457, 7
        %v459 = vsub.s32 2, %v458
        %v460 = vrot.slane %v441, %v459
        %462 = vbcast.lane.b32.xlu0 %v460, 256
        %v463 = vpop.permute.xlu0 %462
        %v464 = vlaneseq
        %v465 = vshrl.u32 %v464, 7
        %v466 = vsub.s32 3, %v465
        %v467 = vrot.slane %v441, %v466
        %469 = vbcast.lane.b32.xlu0 %v467, 256
        %v470 = vpop.permute.xlu0 %469
        %v471 = vlaneseq
        %v472 = vshrl.u32 %v471, 7
        %v473 = vsub.s32 4, %v472
        %v474 = vrot.slane %v441, %v473
        %476 = vbcast.lane.b32.xlu0 %v474, 256
        %v477 = vpop.permute.xlu0 %476
        %v478 = vlaneseq
        %v479 = vshrl.u32 %v478, 7
        %v480 = vsub.s32 5, %v479
        %v481 = vrot.slane %v441, %v480
        %483 = vbcast.lane.b32.xlu0 %v481, 256
        %v484 = vpop.permute.xlu0 %483
        %v485 = vlaneseq
        %v486 = vshrl.u32 %v485, 7
        %v487 = vsub.s32 6, %v486
        %v488 = vrot.slane %v441, %v487
        %490 = vbcast.lane.b32.xlu0 %v488, 256
        %v491 = vpop.permute.xlu0 %490
        %v492 = vlaneseq
        %v493 = vshrl.u32 %v492, 7
        %v494 = vsub.s32 7, %v493
        %v495 = vrot.slane %v441, %v494
        %497 = vbcast.lane.b32.xlu0 %v495, 256
        %v498 = vpop.permute.xlu0 %497
        %v499 = vmul.f32 %v272, %v449
        %v500 = vmul.f32 %v273, %v456
        %v501 = vmul.f32 %v274, %v463
        %v502 = vmul.f32 %v275, %v470
        %v503 = vmul.f32 %v276, %v477
        %v504 = vmul.f32 %v277, %v484
        %v505 = vmul.f32 %v278, %v491
        %v506 = vmul.f32 %v279, %v498
        %v507 = vsel %vm297, %v499, 0.0
        %v508 = vrot.slane %v507, 4
        %v509 = vadd.f32 %v507, %v508
        %v510 = vrot.slane %v509, 2
        %v511 = vadd.f32 %v509, %v510
        %v512 = vrot.slane %v511, 1
        %v513 = vadd.f32 %v511, %v512
        %v514 = vsel %vm297, %v500, 0.0
        %v515 = vrot.slane %v514, 4
        %v516 = vadd.f32 %v514, %v515
        %v517 = vrot.slane %v516, 2
        %v518 = vadd.f32 %v516, %v517
        %v519 = vrot.slane %v518, 1
        %v520 = vadd.f32 %v518, %v519
        %v521 = vsel %vm297, %v501, 0.0
        %v522 = vrot.slane %v521, 4
        %v523 = vadd.f32 %v521, %v522
        %v524 = vrot.slane %v523, 2
        %v525 = vadd.f32 %v523, %v524
        %v526 = vrot.slane %v525, 1
        %v527 = vadd.f32 %v525, %v526
        %v528 = vsel %vm297, %v502, 0.0
        %v529 = vrot.slane %v528, 4
        %v530 = vadd.f32 %v528, %v529
        %v531 = vrot.slane %v530, 2
        %v532 = vadd.f32 %v530, %v531
        %v533 = vrot.slane %v532, 1
        %v534 = vadd.f32 %v532, %v533
        %v535 = vsel %vm297, %v503, 0.0
        %v536 = vrot.slane %v535, 4
        %v537 = vadd.f32 %v535, %v536
        %v538 = vrot.slane %v537, 2
        %v539 = vadd.f32 %v537, %v538
        %v540 = vrot.slane %v539, 1
        %v541 = vadd.f32 %v539, %v540
        %v542 = vsel %vm297, %v504, 0.0
        %v543 = vrot.slane %v542, 4
        %v544 = vadd.f32 %v542, %v543
        %v545 = vrot.slane %v544, 2
        %v546 = vadd.f32 %v544, %v545
        %v547 = vrot.slane %v546, 1
        %v548 = vadd.f32 %v546, %v547
        %v549 = vsel %vm297, %v505, 0.0
        %v550 = vrot.slane %v549, 4
        %v551 = vadd.f32 %v549, %v550
        %v552 = vrot.slane %v551, 2
        %v553 = vadd.f32 %v551, %v552
        %v554 = vrot.slane %v553, 1
        %v555 = vadd.f32 %v553, %v554
        %v556 = vsel %vm297, %v506, 0.0
        %v557 = vrot.slane %v556, 4
        %v558 = vadd.f32 %v556, %v557
        %v559 = vrot.slane %v558, 2
        %v560 = vadd.f32 %v558, %v559
        %v561 = vrot.slane %v560, 1
        %v562 = vadd.f32 %v560, %v561
        %v571 = vsel %vm414, %v520, %v513
        %v572 = vsel %vm416, %v527, %v571
        %v573 = vsel %vm418, %v534, %v572
        %v574 = vsel %vm420, %v541, %v573
        %v575 = vsel %vm422, %v548, %v574
        %v576 = vsel %vm424, %v555, %v575
        %v577 = vsel %vm426, %v562, %v576
        %579 = vst.msk [vmem:[%s256] sm:$0xff] %vm297, %v577
        %s580 = sand.u32 %s125, 1
        %s581 = scalar_lea.sflag [#allocation4], %s580
        %s582 = sand.u32 %s125, 1
        %s583 = smul.addr %s582, 8
        %s584 = scalar_lea.vmem [#allocation5], %s583
        %p585 = scmp.lt.s32.totalorder %s23, 1
        %s586 = scalar_select %p585, %s23, 1
        %s587 = smul.addr %s586, 8
        %s588 = scalar_lea.vmem %s5, %s587
        // Predicated region
        $region41: #{attention_forward.1} parent=35 // pred_check
          %p589 = pneg %p135
        $region42: #{attention_forward.1} parent=35 // pred_check_branch
          %591 = sbr.rel (%p589) target = $region44
        $region43: #{attention_forward.1} parent=35 // pred_region
          %s593 = ssub.s32 128, 128
          %594 = vsyncadd %s581, %s593
          %s595 = smul.addr %s23, 128
          %s596 = scalar_lea.hbm %s4, %s595
          %s598 = sshll.u32 %s584, 4
          %s599 = int_to_ptr.vmem [resolvable:$true] %s598
          %601 = dma.vmem_to_hbm [thread:$0]  %s599, 128, %s596, %s581
        $region44: #{attention_forward.1} parent=35 // pred_fallthru
          _
        // Predicated region
        $region45: #{attention_forward.1} parent=35 // pred_check
          %p602 = pneg %p161
        $region46: #{attention_forward.1} parent=35 // pred_check_branch
          %604 = sbr.rel (%p602) target = $region48
        $region47: #{attention_forward.1} parent=35 // pred_region
          _
        $region48: #{attention_forward.1} parent=35 // pred_fallthru
          _
      $region36: #{attention_forward.1} parent=5 // pred_fallthru
        _
      %p605 = scmp.le.s32.totalorder 2, %s18
      // Predicated region
      $region49: #{attention_forward.1} parent=5 // pred_check
        %p606 = pneg %p605
      $region50: #{attention_forward.1} parent=5 // pred_check_branch
        %608 = sbr.rel (%p606) target = $region52
      $region51: #{attention_forward.1} parent=5 // pred_region
        %s609 = ssub.s32 %s18, 2
        // Predicated region
        $region53: #{attention_forward.1} parent=51 // pred_check
          %p610 = pneg %p141
        $region54: #{attention_forward.1} parent=51 // pred_check_branch
          %612 = sbr.rel (%p610) target = $region56
        $region55: #{attention_forward.1} parent=51 // pred_region
          %s613 = sand.u32 %s126, 1
          %s614 = scalar_lea.sflag [#allocation4], %s613
          %s615 = sand.u32 %s126, 1
          %s616 = smul.addr %s615, 8
          %s617 = scalar_lea.vmem [#allocation5], %s616
          %618 = dma.done %s614, 128
        $region56: #{attention_forward.1} parent=51 // pred_fallthru
          _
        // Predicated region
        $region57: #{attention_forward.1} parent=51 // pred_check
          %p619 = pneg %p167
        $region58: #{attention_forward.1} parent=51 // pred_check_branch
          %621 = sbr.rel (%p619) target = $region60
        $region59: #{attention_forward.1} parent=51 // pred_region
          %p622 = scmp.lt.s32.totalorder %s24, 1
          %s623 = scalar_select %p622, %s24, 1
          %s624 = smul.addr %s623, 8
          %s625 = scalar_lea.vmem %s5, %s624
        $region60: #{attention_forward.1} parent=51 // pred_fallthru
          _
      $region52: #{attention_forward.1} parent=5 // pred_fallthru
        _
    $region6: #{attention_forward.1} parent=1 // loop_footer
      %s22 = sadd.s32 1, %s18
    $region7: #{attention_forward.1} parent=1 // loop_footer_branch
      %17 = sbr.rel target = $region3
    $region8: #{attention_forward.1} parent=1 // loop_exit
      _
    %626 = vsyncpa [#allocation3], 1
    %s627 = scalar_lea.sflag [#allocation3], 1
    %628 = vsyncpa %s627, 1
    %629 = vsyncpa [#allocation4], 1
    %s630 = scalar_lea.sflag [#allocation4], 1
    %631 = vsyncpa %s630, 1

</llo_original>
